<compile_context>
chip_gen: v7x
topology: tpu7x:2x2x1
jax: 0.10.0
libtpu: 0.0.40
codegen_flags: <defaults>
</compile_context>

<pallas_src>
import functools

import jax
import jax.numpy as jnp
from jax.experimental import pallas as pl
from jax.experimental.pallas import tpu as pltpu


def _round_up(x, m):
    return ((x + m - 1) // m) * m


def mcts_mlp_kernel(a_ref, p_ref, w1a_ref, w1b_ref, b1_ref, w2_ref, b2_ref, out_ref):
    """Feature-major MLP tile: batch on the 128-lane axis.

    a_ref, p_ref : (T, B_TILE)  transposed actions / probas tile
    w1a_ref      : (hid, T)     = W1[:T].T  (acts on the actions half)
    w1b_ref      : (hid, T)     = W1[T:].T  (acts on the probas half)
    b1_ref       : (hid, 1)
    w2_ref       : (2, hid)
    b2_ref       : (2, 1)
    out_ref      : (2, B_TILE)  row 0 = value, row 1 = sigmoid(policy)
    """
    a = a_ref[...]
    p = p_ref[...]
    # hidden = W1^T @ concat(a, p) + b1, without materializing the concat.
    h = (jnp.dot(w1a_ref[...], a, preferred_element_type=jnp.float32)
         + jnp.dot(w1b_ref[...], p, preferred_element_type=jnp.float32)
         + b1_ref[...])
    h = jnp.maximum(h, 0.0)                                    # ReLU
    z = jnp.dot(w2_ref[...], h, preferred_element_type=jnp.float32) + b2_ref[...]
    # Sigmoid only on the policy row; value row is identity.
    out_ref[...] = jnp.concatenate(
        [z[0:1, :], jax.nn.sigmoid(z[1:2, :])], axis=0).astype(out_ref.dtype)


def init_params(tree_height, key):
    """Deterministic PyTorch-Linear-style init (uniform +-1/sqrt(fan_in)).

    Weights stored as (in_features, out_features), biases as (out_features,),
    so the math is x @ W + b (== PyTorch's x @ W.T + b).
    """
    h_size = 2 * (tree_height - 1)
    hid = h_size // 2
    k1, k2, k3, k4 = jax.random.split(key, 4)
    bnd1 = 1.0 / jnp.sqrt(h_size)
    bnd2 = 1.0 / jnp.sqrt(hid)
    w1 = jax.random.uniform(k1, (h_size, hid), jnp.float32, -bnd1, bnd1)
    b1 = jax.random.uniform(k2, (hid,), jnp.float32, -bnd1, bnd1)
    w2 = jax.random.uniform(k3, (hid, 2), jnp.float32, -bnd2, bnd2)
    b2 = jax.random.uniform(k4, (2,), jnp.float32, -bnd2, bnd2)
    return w1, b1, w2, b2


@functools.partial(jax.jit, static_argnames=("tree_height",))
def mcts_forward(actions_history, probas_history, params, tree_height):
    T = tree_height - 1
    hid = T  # h_size // 2 == tree_height - 1
    a = actions_history.reshape(-1, T).astype(jnp.float32)
    p = probas_history.reshape(-1, T).astype(jnp.float32)
    B = a.shape[0]

    w1, b1, w2, b2 = params
    # Feature-major parameter views; W1 split so no (B, 2T) concat is needed.
    w1a_t = jnp.transpose(w1[:T, :])      # (hid, T)
    w1b_t = jnp.transpose(w1[T:, :])      # (hid, T)
    b1c = b1.reshape(hid, 1)              # (hid, 1)
    w2_t = jnp.transpose(w2)              # (2, hid)
    b2c = b2.reshape(2, 1)                # (2, 1)

    # Lane-dense layout: batch on the lane axis, padded to a tile multiple.
    b_tile = min(2048, _round_up(B, 128))
    b_pad = _round_up(B, b_tile)
    a_t = jnp.transpose(a)                # (T, B)
    p_t = jnp.transpose(p)
    if b_pad != B:
        a_t = jnp.pad(a_t, ((0, 0), (0, b_pad - B)))
        p_t = jnp.pad(p_t, ((0, 0), (0, b_pad - B)))

    out_t = pl.pallas_call(
        mcts_mlp_kernel,
        out_shape=jax.ShapeDtypeStruct((2, b_pad), jnp.float32),
        grid=(b_pad // b_tile,),
        in_specs=[
            pl.BlockSpec((T, b_tile), lambda i: (0, i)),
            pl.BlockSpec((T, b_tile), lambda i: (0, i)),
            # Grid-invariant weights: constant block index -> stay VMEM-resident.
            pl.BlockSpec((hid, T), lambda i: (0, 0)),
            pl.BlockSpec((hid, T), lambda i: (0, 0)),
            pl.BlockSpec((hid, 1), lambda i: (0, 0)),
            pl.BlockSpec((2, hid), lambda i: (0, 0)),
            pl.BlockSpec((2, 1), lambda i: (0, 0)),
        ],
        out_specs=pl.BlockSpec((2, b_tile), lambda i: (0, i)),
        compiler_params=pltpu.CompilerParams(
            dimension_semantics=("parallel",)),
    )(a_t, p_t, w1a_t, w1b_t, b1c, w2_t, b2c)

    # Back to batch-major (B, 2); drop padded columns.
    return jnp.transpose(out_t[:, :B])


if __name__ == "__main__":
    tree_height = 9            # -> h_size = 16, hidden = 8
    batch = 8

    key = jax.random.PRNGKey(0)
    k_params, k_act, k_prob = jax.random.split(key, 3)

    params = init_params(tree_height, k_params)

    # actions are {0,1}-like, probas are in [0,1]
    actions_history = jax.random.bernoulli(
        k_act, 0.5, (batch, tree_height - 1)).astype(jnp.float32)
    probas_history = jax.random.uniform(
        k_prob, (batch, tree_height - 1), jnp.float32)

    out = mcts_forward(actions_history, probas_history, params, tree_height)
    out = jax.block_until_ready(out)

    # Pure-JAX reference for sanity check (mirrors the PyTorch forward).
    inp = jnp.concatenate(
        [actions_history.reshape(-1, tree_height - 1),
         probas_history.reshape(-1, tree_height - 1)], axis=1)
    w1, b1, w2, b2 = params
    h_ref = jnp.maximum(inp @ w1 + b1, 0.0)
    z_ref = h_ref @ w2 + b2
    ref = jnp.concatenate(
        [z_ref[:, 0:1], jax.nn.sigmoid(z_ref[:, 1:2])], axis=1)

    assert out.shape == (batch, 2)
    assert jnp.allclose(out, ref, atol=1e-5, rtol=1e-5)
    print("KERNEL_OK")
</pallas_src>

<mosaic_0001>
module attributes {stable_mosaic.version = 11 : i64} {
  func.func @mcts_mlp_kernel(%arg0: i32, %arg1: memref<8x128xf32, #tpu.memory_space<vmem>>, %arg2: memref<8x128xf32, #tpu.memory_space<vmem>>, %arg3: memref<8x8xf32, #tpu.memory_space<vmem>>, %arg4: memref<8x8xf32, #tpu.memory_space<vmem>>, %arg5: memref<8x1xf32, #tpu.memory_space<vmem>>, %arg6: memref<2x8xf32, #tpu.memory_space<vmem>>, %arg7: memref<2x1xf32, #tpu.memory_space<vmem>>, %arg8: memref<2x128xf32, #tpu.memory_space<vmem>>) attributes {dimension_semantics = [#tpu.dimension_semantics<parallel>], iteration_bounds = array<i64: 1>, scalar_prefetch = 0 : i64, scratch_operands = 0 : i64, tpu.core_type = #tpu.core_type<tc>, window_params = [{transform_indices = @transform_0, window_bounds = array<i64: 8, 128>}, {transform_indices = @transform_1, window_bounds = array<i64: 8, 128>}, {pipeline_mode = #tpu.pipeline_mode<synchronous>, transform_indices = @transform_2, window_bounds = array<i64: 8, 8>}, {pipeline_mode = #tpu.pipeline_mode<synchronous>, transform_indices = @transform_3, window_bounds = array<i64: 8, 8>}, {pipeline_mode = #tpu.pipeline_mode<synchronous>, transform_indices = @transform_4, window_bounds = array<i64: 8, 1>}, {pipeline_mode = #tpu.pipeline_mode<synchronous>, transform_indices = @transform_5, window_bounds = array<i64: 2, 8>}, {pipeline_mode = #tpu.pipeline_mode<synchronous>, transform_indices = @transform_6, window_bounds = array<i64: 2, 1>}, {transform_indices = @transform_7, window_bounds = array<i64: 2, 128>}]} {
    %c0 = arith.constant 0 : index
    %c0_0 = arith.constant 0 : index
    %0 = vector.load %arg1[%c0, %c0_0] : memref<8x128xf32, #tpu.memory_space<vmem>>, vector<8x128xf32>
    %c0_1 = arith.constant 0 : index
    %c0_2 = arith.constant 0 : index
    %1 = vector.load %arg2[%c0_1, %c0_2] : memref<8x128xf32, #tpu.memory_space<vmem>>, vector<8x128xf32>
    %c0_3 = arith.constant 0 : index
    %c0_4 = arith.constant 0 : index
    %2 = vector.load %arg3[%c0_3, %c0_4] : memref<8x8xf32, #tpu.memory_space<vmem>>, vector<8x8xf32>
    %cst = arith.constant dense<0.000000e+00> : vector<8x128xf32>
    %3 = tpu.matmul %2, %0, %cst {dimension_numbers = #tpu.dot_dimension_numbers<[1], [0], [0], [1], [0, 0, 1, 1], [], []>} : vector<8x8xf32>, vector<8x128xf32>, vector<8x128xf32> -> vector<8x128xf32>
    %c0_5 = arith.constant 0 : index
    %c0_6 = arith.constant 0 : index
    %4 = vector.load %arg4[%c0_5, %c0_6] : memref<8x8xf32, #tpu.memory_space<vmem>>, vector<8x8xf32>
    %cst_7 = arith.constant dense<0.000000e+00> : vector<8x128xf32>
    %5 = tpu.matmul %4, %1, %cst_7 {dimension_numbers = #tpu.dot_dimension_numbers<[1], [0], [0], [1], [0, 0, 1, 1], [], []>} : vector<8x8xf32>, vector<8x128xf32>, vector<8x128xf32> -> vector<8x128xf32>
    %6 = arith.addf %3, %5 : vector<8x128xf32>
    %c0_8 = arith.constant 0 : index
    %c0_9 = arith.constant 0 : index
    %7 = vector.load %arg5[%c0_8, %c0_9] : memref<8x1xf32, #tpu.memory_space<vmem>>, vector<8x1xf32>
    %8 = vector.broadcast %7 : vector<8x1xf32> to vector<8x128xf32>
    %9 = arith.addf %6, %8 : vector<8x128xf32>
    %cst_10 = arith.constant 0.000000e+00 : f32
    %10 = vector.broadcast %cst_10 : f32 to vector<8x128xf32>
    %11 = arith.maximumf %9, %10 : vector<8x128xf32>
    %c0_11 = arith.constant 0 : index
    %c0_12 = arith.constant 0 : index
    %12 = vector.load %arg6[%c0_11, %c0_12] : memref<2x8xf32, #tpu.memory_space<vmem>>, vector<2x8xf32>
    %cst_13 = arith.constant dense<0.000000e+00> : vector<2x128xf32>
    %13 = tpu.matmul %12, %11, %cst_13 {dimension_numbers = #tpu.dot_dimension_numbers<[1], [0], [0], [1], [0, 0, 1, 1], [], []>} : vector<2x8xf32>, vector<8x128xf32>, vector<2x128xf32> -> vector<2x128xf32>
    %c0_14 = arith.constant 0 : index
    %c0_15 = arith.constant 0 : index
    %14 = vector.load %arg7[%c0_14, %c0_15] : memref<2x1xf32, #tpu.memory_space<vmem>>, vector<2x1xf32>
    %15 = vector.broadcast %14 : vector<2x1xf32> to vector<2x128xf32>
    %16 = arith.addf %13, %15 : vector<2x128xf32>
    %17 = vector.extract_strided_slice %16 {offsets = [0, 0], sizes = [1, 128], strides = [1, 1]} : vector<2x128xf32> to vector<1x128xf32>
    %18 = vector.extract_strided_slice %16 {offsets = [1, 0], sizes = [1, 128], strides = [1, 1]} : vector<2x128xf32> to vector<1x128xf32>
    %19 = arith.negf %18 : vector<1x128xf32>
    %20 = math.exp %19 : vector<1x128xf32>
    %cst_16 = arith.constant 1.000000e+00 : f32
    %21 = vector.broadcast %cst_16 : f32 to vector<1x128xf32>
    %22 = arith.addf %21, %20 : vector<1x128xf32>
    %23 = arith.divf %21, %22 : vector<1x128xf32>
    %24 = tpu.concatenate %17, %23 in 0 : vector<1x128xf32>, vector<1x128xf32> -> vector<2x128xf32>
    %c0_17 = arith.constant 0 : index
    %c0_18 = arith.constant 0 : index
    %25 = vector.load %arg8[%c0_17, %c0_18] : memref<2x128xf32, #tpu.memory_space<vmem>>, vector<2x128xf32>
    tpu.vector_store %arg8[%c0_17, %c0_18], %24 {strides = array<i32>} : memref<2x128xf32, #tpu.memory_space<vmem>>, vector<2x128xf32>,
    return
  }
  func.func @transform_0(%arg0: i32) -> (i32, i32) {
    %c0_i32 = arith.constant 0 : i32
    %c0_i32_0 = arith.constant 0 : i32
    return %c0_i32, %arg0 : i32, i32
  }
  func.func @transform_1(%arg0: i32) -> (i32, i32) {
    %c0_i32 = arith.constant 0 : i32
    %c0_i32_0 = arith.constant 0 : i32
    return %c0_i32, %arg0 : i32, i32
  }
  func.func @transform_2(%arg0: i32) -> (i32, i32) {
    %c0_i32 = arith.constant 0 : i32
    %c0_i32_0 = arith.constant 0 : i32
    %c0_i32_1 = arith.constant 0 : i32
    return %c0_i32, %c0_i32_0 : i32, i32
  }
  func.func @transform_3(%arg0: i32) -> (i32, i32) {
    %c0_i32 = arith.constant 0 : i32
    %c0_i32_0 = arith.constant 0 : i32
    %c0_i32_1 = arith.constant 0 : i32
    return %c0_i32, %c0_i32_0 : i32, i32
  }
  func.func @transform_4(%arg0: i32) -> (i32, i32) {
    %c0_i32 = arith.constant 0 : i32
    %c0_i32_0 = arith.constant 0 : i32
    %c0_i32_1 = arith.constant 0 : i32
    return %c0_i32, %c0_i32_0 : i32, i32
  }
  func.func @transform_5(%arg0: i32) -> (i32, i32) {
    %c0_i32 = arith.constant 0 : i32
    %c0_i32_0 = arith.constant 0 : i32
    %c0_i32_1 = arith.constant 0 : i32
    return %c0_i32, %c0_i32_0 : i32, i32
  }
  func.func @transform_6(%arg0: i32) -> (i32, i32) {
    %c0_i32 = arith.constant 0 : i32
    %c0_i32_0 = arith.constant 0 : i32
    %c0_i32_1 = arith.constant 0 : i32
    return %c0_i32, %c0_i32_0 : i32, i32
  }
  func.func @transform_7(%arg0: i32) -> (i32, i32) {
    %c0_i32 = arith.constant 0 : i32
    %c0_i32_0 = arith.constant 0 : i32
    return %c0_i32, %arg0 : i32, i32
  }
}

</mosaic_0001>

<llo_original>
// kernel: mcts_forward.1
$region0: #{mcts_forward.1}
  #allocation0 [shape = 'u32[]', space=smem, size = 0x4, offset = 0x4, fixed_abs, tag = 'smem constant byte address 0x4 - core index']
  #allocation1 [shape = 'u32[144,128]{1,0:T(1,128)}', space=vmem, size = 0x12000, scoped, tag = 'internal scratch']
  %s0 = inlined_call_operand.vmem [shape: f32[8,128], index: 0, kind: input, shape index: {}]
  %s1 = inlined_call_operand.vmem [shape: f32[8,128], index: 1, kind: input, shape index: {}]
  %s2 = inlined_call_operand.vmem [shape: f32[8,8], index: 2, kind: input, shape index: {}]
  %s3 = inlined_call_operand.vmem [shape: f32[8,8], index: 3, kind: input, shape index: {}]
  %s4 = inlined_call_operand.vmem [shape: f32[8,1], index: 4, kind: input, shape index: {}]
  %s5 = inlined_call_operand.vmem [shape: f32[2,8], index: 5, kind: input, shape index: {}]
  %s6 = inlined_call_operand.vmem [shape: f32[2,1], index: 6, kind: input, shape index: {}]
  %s7 = inlined_call_operand.vmem [shape: f32[2,128], index: 7, kind: output, shape index: {}]
  %s8 = sld [smem:[#allocation0]]
  $region38: #{mcts_forward.1} parent=0
    _
  %s10 = ssub.s32 1, %s8
  %s11 = scalar_select 0, %s10, %s8
  // Predicated region
  $region2: #{mcts_forward.1} parent=0 // pred_check
    _
  $region3: #{mcts_forward.1} parent=0 // pred_check_branch
    %13 = sbr.rel (0) target = $region5
  $region4: #{mcts_forward.1} parent=0 // pred_region
    _
  $region5: #{mcts_forward.1} parent=0 // pred_fallthru
    _
  // Predicated region
  $region6: #{mcts_forward.1} parent=0 // pred_check
    _
  $region7: #{mcts_forward.1} parent=0 // pred_check_branch
    %15 = sbr.rel (0) target = $region9
  $region8: #{mcts_forward.1} parent=0 // pred_region
    _
  $region9: #{mcts_forward.1} parent=0 // pred_fallthru
    _
  // Predicated region
  $region10: #{mcts_forward.1} parent=0 // pred_check
    _
  $region11: #{mcts_forward.1} parent=0 // pred_check_branch
    %17 = sbr.rel (0) target = $region13
  $region12: #{mcts_forward.1} parent=0 // pred_region
    _
  $region13: #{mcts_forward.1} parent=0 // pred_fallthru
    _
  // Predicated region
  $region14: #{mcts_forward.1} parent=0 // pred_check
    _
  $region15: #{mcts_forward.1} parent=0 // pred_check_branch
    %19 = sbr.rel (0) target = $region17
  $region16: #{mcts_forward.1} parent=0 // pred_region
    _
  $region17: #{mcts_forward.1} parent=0 // pred_fallthru
    _
  // Predicated region
  $region18: #{mcts_forward.1} parent=0 // pred_check
    _
  $region19: #{mcts_forward.1} parent=0 // pred_check_branch
    %21 = sbr.rel (0) target = $region21
  $region20: #{mcts_forward.1} parent=0 // pred_region
    _
  $region21: #{mcts_forward.1} parent=0 // pred_fallthru
    _
  // Predicated region
  $region22: #{mcts_forward.1} parent=0 // pred_check
    _
  $region23: #{mcts_forward.1} parent=0 // pred_check_branch
    %23 = sbr.rel (0) target = $region25
  $region24: #{mcts_forward.1} parent=0 // pred_region
    _
  $region25: #{mcts_forward.1} parent=0 // pred_fallthru
    _
  // Predicated region
  $region26: #{mcts_forward.1} parent=0 // pred_check
    _
  $region27: #{mcts_forward.1} parent=0 // pred_check_branch
    %25 = sbr.rel (0) target = $region29
  $region28: #{mcts_forward.1} parent=0 // pred_region
    _
  $region29: #{mcts_forward.1} parent=0 // pred_fallthru
    _
  %v26 = vld [vmem:[%s0] sm:$0xff]
  %v27 = vld [vmem:[%s1] sm:$0xff]
  %v28 = vld [vmem:[%s2] sm:$0xff]
  %v29 = vld [vmem:[%s3] sm:$0xff]
  %vm30 = vcmask 64512
  %v32 = vsel %vm30, %v29, 0
  %34 = vmatprep.subr.mxu0 0.0
  %35 = vmatpush1.msra.mxu0 %v27
  %36 = vmatprep.subr.mxu0 0.0
  %37 = vmatpush1.msra.mxu0 0.0
  %38 = vmatprep.subr.mxu0 0.0
  %39 = vmatpush1.msra.mxu0 0.0
  %40 = vmatprep.subr.mxu0 0.0
  %41 = vmatpush1.msra.mxu0 0.0
  %42 = vmatprep.subr.mxu0 0.0
  %43 = vmatpush1.msra.mxu0 0.0
  %44 = vmatprep.subr.mxu0 0.0
  %45 = vmatpush1.msra.mxu0 0.0
  %46 = vmatprep.subr.mxu0 0.0
  %47 = vmatpush1.msra.mxu0 0.0
  %48 = vmatprep.subr.mxu0 0.0
  %49 = vmatpush1.msra.mxu0 0.0
  %50 = vmatprep.subr.mxu0 0.0
  %51 = vmatpush1.msra.mxu0 0.0
  %52 = vmatprep.subr.mxu0 0.0
  %53 = vmatpush1.msra.mxu0 0.0
  %54 = vmatprep.subr.mxu0 0.0
  %55 = vmatpush1.msra.mxu0 0.0
  %56 = vmatprep.subr.mxu0 0.0
  %57 = vmatpush1.msra.mxu0 0.0
  %58 = vmatprep.subr.mxu0 0.0
  %59 = vmatpush1.msra.mxu0 0.0
  %60 = vmatprep.subr.mxu0 0.0
  %61 = vmatpush1.msra.mxu0 0.0
  %62 = vmatprep.subr.mxu0 0.0
  %63 = vmatpush1.msra.mxu0 0.0
  %64 = vmatprep.subr.mxu0 0.0
  %65 = vmatpush1.msra.mxu0 0.0
  %66 = vmatprep.subr.mxu0 0.0
  %67 = vmatpush1.msra.mxu0 0.0
  %68 = vmatprep.subr.mxu0 0.0
  %69 = vmatpush1.msra.mxu0 0.0
  %70 = vmatprep.subr.mxu0 0.0
  %71 = vmatpush1.msra.mxu0 0.0
  %72 = vmatprep.subr.mxu0 0.0
  %73 = vmatpush1.msra.mxu0 0.0
  %74 = vmatprep.subr.mxu0 0.0
  %75 = vmatpush1.msra.mxu0 0.0
  %76 = vmatprep.subr.mxu0 0.0
  %77 = vmatpush1.msra.mxu0 0.0
  %78 = vmatprep.subr.mxu0 0.0
  %79 = vmatpush1.msra.mxu0 0.0
  %80 = vmatprep.subr.mxu0 0.0
  %81 = vmatpush1.msra.mxu0 0.0
  %82 = vmatprep.subr.mxu0 0.0
  %83 = vmatpush1.msra.mxu0 0.0
  %84 = vmatprep.subr.mxu0 0.0
  %85 = vmatpush1.msra.mxu0 0.0
  %86 = vmatprep.subr.mxu0 0.0
  %87 = vmatpush1.msra.mxu0 0.0
  %88 = vmatprep.subr.mxu0 0.0
  %89 = vmatpush1.msra.mxu0 0.0
  %90 = vmatprep.subr.mxu0 0.0
  %91 = vmatpush1.msra.mxu0 0.0
  %92 = vmatprep.subr.mxu0 0.0
  %93 = vmatpush1.msra.mxu0 0.0
  %94 = vmatprep.subr.mxu0 0.0
  %95 = vmatpush1.msra.mxu0 0.0
  %96 = vmatprep.subr.mxu0 0.0
  %97 = vmatpush1.msra.mxu0 0.0
  %98 = vmatprep.mubr.f32.mxu0 0.0
  %99 = vmatmul.mubr.f32.gmra.mrb[0].mxu0 %v32
  %v100 = vpop.f32.mrb[0].mxu0
  %v101 = vadd.f32 0.0, %v100
  %v102 = vpop.f32.mrb[0].mxu0
  %103 = vdwg.mxu0
  %v105 = vsel %vm30, %v28, 0
  %107 = vmatprep.subr.mxu0 0.0
  %108 = vmatpush1.msra.mxu0 %v26
  %109 = vmatprep.subr.mxu0 0.0
  %110 = vmatpush1.msra.mxu0 0.0
  %111 = vmatprep.subr.mxu0 0.0
  %112 = vmatpush1.msra.mxu0 0.0
  %113 = vmatprep.subr.mxu0 0.0
  %114 = vmatpush1.msra.mxu0 0.0
  %115 = vmatprep.subr.mxu0 0.0
  %116 = vmatpush1.msra.mxu0 0.0
  %117 = vmatprep.subr.mxu0 0.0
  %118 = vmatpush1.msra.mxu0 0.0
  %119 = vmatprep.subr.mxu0 0.0
  %120 = vmatpush1.msra.mxu0 0.0
  %121 = vmatprep.subr.mxu0 0.0
  %122 = vmatpush1.msra.mxu0 0.0
  %123 = vmatprep.subr.mxu0 0.0
  %124 = vmatpush1.msra.mxu0 0.0
  %125 = vmatprep.subr.mxu0 0.0
  %126 = vmatpush1.msra.mxu0 0.0
  %127 = vmatprep.subr.mxu0 0.0
  %128 = vmatpush1.msra.mxu0 0.0
  %129 = vmatprep.subr.mxu0 0.0
  %130 = vmatpush1.msra.mxu0 0.0
  %131 = vmatprep.subr.mxu0 0.0
  %132 = vmatpush1.msra.mxu0 0.0
  %133 = vmatprep.subr.mxu0 0.0
  %134 = vmatpush1.msra.mxu0 0.0
  %135 = vmatprep.subr.mxu0 0.0
  %136 = vmatpush1.msra.mxu0 0.0
  %137 = vmatprep.subr.mxu0 0.0
  %138 = vmatpush1.msra.mxu0 0.0
  %139 = vmatprep.subr.mxu0 0.0
  %140 = vmatpush1.msra.mxu0 0.0
  %141 = vmatprep.subr.mxu0 0.0
  %142 = vmatpush1.msra.mxu0 0.0
  %143 = vmatprep.subr.mxu0 0.0
  %144 = vmatpush1.msra.mxu0 0.0
  %145 = vmatprep.subr.mxu0 0.0
  %146 = vmatpush1.msra.mxu0 0.0
  %147 = vmatprep.subr.mxu0 0.0
  %148 = vmatpush1.msra.mxu0 0.0
  %149 = vmatprep.subr.mxu0 0.0
  %150 = vmatpush1.msra.mxu0 0.0
  %151 = vmatprep.subr.mxu0 0.0
  %152 = vmatpush1.msra.mxu0 0.0
  %153 = vmatprep.subr.mxu0 0.0
  %154 = vmatpush1.msra.mxu0 0.0
  %155 = vmatprep.subr.mxu0 0.0
  %156 = vmatpush1.msra.mxu0 0.0
  %157 = vmatprep.subr.mxu0 0.0
  %158 = vmatpush1.msra.mxu0 0.0
  %159 = vmatprep.subr.mxu0 0.0
  %160 = vmatpush1.msra.mxu0 0.0
  %161 = vmatprep.subr.mxu0 0.0
  %162 = vmatpush1.msra.mxu0 0.0
  %163 = vmatprep.subr.mxu0 0.0
  %164 = vmatpush1.msra.mxu0 0.0
  %165 = vmatprep.subr.mxu0 0.0
  %166 = vmatpush1.msra.mxu0 0.0
  %167 = vmatprep.subr.mxu0 0.0
  %168 = vmatpush1.msra.mxu0 0.0
  %169 = vmatprep.subr.mxu0 0.0
  %170 = vmatpush1.msra.mxu0 0.0
  %171 = vmatprep.mubr.f32.mxu0 0.0
  %172 = vmatmul.mubr.f32.gmra.mrb[0].mxu0 %v105
  %v173 = vpop.f32.mrb[0].mxu0
  %v174 = vadd.f32 %v101, %v173
  %v175 = vpop.f32.mrb[0].mxu0
  %176 = vdwg.mxu0
  %v177 = vld [vmem:[%s4] sm:$0xff]
  %179 = vset.pattern.permute.xlu0 0
  %180 = vperm.xlu0 %179, %v177
  %v181 = vpop.permute.xlu0 %180
  %v183 = vadd.f32 %v174, %v181
  %v184 = vmax.f32 %v183, 0.0
  %v185 = vld [vmem:[%s5] sm:$0x3]
  %v186 = vld [vmem:[%s6] sm:$0x3]
  %188 = vset.pattern.permute.xlu0 0
  %189 = vperm.xlu0 %188, %v186
  %v190 = vpop.permute.xlu0 %189
  %v193 = vsel %vm30, %v185, 0
  %195 = vmatprep.subr.mxu0 0.0
  %196 = vmatpush1.msra.mxu0 %v184
  %197 = vmatprep.subr.mxu0 0.0
  %198 = vmatpush1.msra.mxu0 0.0
  %199 = vmatprep.subr.mxu0 0.0
  %200 = vmatpush1.msra.mxu0 0.0
  %201 = vmatprep.subr.mxu0 0.0
  %202 = vmatpush1.msra.mxu0 0.0
  %203 = vmatprep.subr.mxu0 0.0
  %204 = vmatpush1.msra.mxu0 0.0
  %205 = vmatprep.subr.mxu0 0.0
  %206 = vmatpush1.msra.mxu0 0.0
  %207 = vmatprep.subr.mxu0 0.0
  %208 = vmatpush1.msra.mxu0 0.0
  %209 = vmatprep.subr.mxu0 0.0
  %210 = vmatpush1.msra.mxu0 0.0
  %211 = vmatprep.subr.mxu0 0.0
  %212 = vmatpush1.msra.mxu0 0.0
  %213 = vmatprep.subr.mxu0 0.0
  %214 = vmatpush1.msra.mxu0 0.0
  %215 = vmatprep.subr.mxu0 0.0
  %216 = vmatpush1.msra.mxu0 0.0
  %217 = vmatprep.subr.mxu0 0.0
  %218 = vmatpush1.msra.mxu0 0.0
  %219 = vmatprep.subr.mxu0 0.0
  %220 = vmatpush1.msra.mxu0 0.0
  %221 = vmatprep.subr.mxu0 0.0
  %222 = vmatpush1.msra.mxu0 0.0
  %223 = vmatprep.subr.mxu0 0.0
  %224 = vmatpush1.msra.mxu0 0.0
  %225 = vmatprep.subr.mxu0 0.0
  %226 = vmatpush1.msra.mxu0 0.0
  %227 = vmatprep.subr.mxu0 0.0
  %228 = vmatpush1.msra.mxu0 0.0
  %229 = vmatprep.subr.mxu0 0.0
  %230 = vmatpush1.msra.mxu0 0.0
  %231 = vmatprep.subr.mxu0 0.0
  %232 = vmatpush1.msra.mxu0 0.0
  %233 = vmatprep.subr.mxu0 0.0
  %234 = vmatpush1.msra.mxu0 0.0
  %235 = vmatprep.subr.mxu0 0.0
  %236 = vmatpush1.msra.mxu0 0.0
  %237 = vmatprep.subr.mxu0 0.0
  %238 = vmatpush1.msra.mxu0 0.0
  %239 = vmatprep.subr.mxu0 0.0
  %240 = vmatpush1.msra.mxu0 0.0
  %241 = vmatprep.subr.mxu0 0.0
  %242 = vmatpush1.msra.mxu0 0.0
  %243 = vmatprep.subr.mxu0 0.0
  %244 = vmatpush1.msra.mxu0 0.0
  %245 = vmatprep.subr.mxu0 0.0
  %246 = vmatpush1.msra.mxu0 0.0
  %247 = vmatprep.subr.mxu0 0.0
  %248 = vmatpush1.msra.mxu0 0.0
  %249 = vmatprep.subr.mxu0 0.0
  %250 = vmatpush1.msra.mxu0 0.0
  %251 = vmatprep.subr.mxu0 0.0
  %252 = vmatpush1.msra.mxu0 0.0
  %253 = vmatprep.subr.mxu0 0.0
  %254 = vmatpush1.msra.mxu0 0.0
  %255 = vmatprep.subr.mxu0 0.0
  %256 = vmatpush1.msra.mxu0 0.0
  %257 = vmatprep.subr.mxu0 0.0
  %258 = vmatpush1.msra.mxu0 0.0
  %259 = vmatprep.mubr.f32.mxu0 0.0
  %260 = vmatmul.mubr.f32.gmra.mrb[0].mxu0 %v193
  %v261 = vpop.f32.mrb[0].mxu0
  %v262 = vadd.f32 %v190, %v261
  %v263 = vpop.f32.mrb[0].mxu0
  %264 = vdwg.mxu0
  %v265 = vxor.u32 %v262, 2147483648
  %v266 = vmul.f32 %v265, 1.442695
  %v267 = vpow.pop %v266
  %v268 = vadd.f32 %v267, 1.0
  %v269 = vrcp.pop %v268
  %v270 = vmul.f32 1.0, %v269
  %vm271 = vcmask 1040384
  %v272 = vsel %vm271, %v262, %v270
  %273 = vst [vmem:[%s7] sm:$0x3] %v272
  // Predicated region
  $region30: #{mcts_forward.1} parent=0 // pred_check
    _
  $region31: #{mcts_forward.1} parent=0 // pred_check_branch
    %275 = sbr.rel (0) target = $region33
  $region32: #{mcts_forward.1} parent=0 // pred_region
    _
  $region33: #{mcts_forward.1} parent=0 // pred_fallthru
    _
  // Predicated region
  $region34: #{mcts_forward.1} parent=0 // pred_check
    _
  $region35: #{mcts_forward.1} parent=0 // pred_check_branch
    %277 = sbr.rel (0) target = $region37
  $region36: #{mcts_forward.1} parent=0 // pred_region
    _
  $region37: #{mcts_forward.1} parent=0 // pred_fallthru
    _

</llo_original>
